<compile_context>
chip_gen: v7x
topology: tpu7x:2x2x1
jax: 0.10.0
libtpu: 0.0.40
codegen_flags: <defaults>
</compile_context>

<pallas_src>
import functools

import jax
import jax.numpy as jnp
import numpy as np
from jax import lax
from jax.experimental import pallas as pl
from jax.experimental.pallas import tpu as pltpu


def greedy_ctc_kernel(emission_ref, out_ref, carry_ref, *, blank, num_labels):
    # emission_ref: (L_pad, T_TILE) logits, labels on sublanes, time on lanes.
    # out_ref:      (1, T_TILE) packed int32 (idx | keep<<16).
    # carry_ref:    SMEM (1,) int32 — previous tile's last argmax index.
    L_pad, T = emission_ref.shape

    @pl.when(pl.program_id(0) == 0)
    def _():
        carry_ref[0] = jnp.int32(-1)  # sentinel: "no previous timestep"

    # --- argmax over the label axis (sublanes), first-index-on-tie ----------
    # Pairwise VPU tree over 8-sublane chunks keeps most of the reduction on
    # otherwise-idle VALU slots; only one final 8-wide XLU reduce remains.
    vals, idxs = [], []
    for k in range(L_pad // 8):
        vals.append(emission_ref[pl.ds(k * 8, 8), :])                      # (8, T)
        idxs.append(lax.broadcasted_iota(jnp.int32, (8, T), 0) + k * 8)
    while len(vals) > 1:
        nv, ni = [], []
        for a in range(0, len(vals) - 1, 2):
            va, vb = vals[a], vals[a + 1]
            ia, ib = idxs[a], idxs[a + 1]
            take_a = va >= vb          # ties -> lower label index (ia < ib)
            nv.append(jnp.maximum(va, vb))
            ni.append(jnp.where(take_a, ia, ib))
        if len(vals) % 2:
            nv.append(vals[-1])
            ni.append(idxs[-1])
        vals, idxs = nv, ni
    v8, i8 = vals[0], idxs[0]                                              # (8, T)
    vmax = jnp.max(v8, axis=0, keepdims=True)                              # (1, T)
    idx = jnp.min(jnp.where(v8 == vmax, i8, L_pad), axis=0, keepdims=True)
    # NaN guard: keep the host-side label lookup in range (torch would return
    # the NaN position; finite logits never hit this branch).
    idx = jnp.minimum(idx, num_labels - 1)                                 # (1, T)

    # --- unique_consecutive + blank removal, expressed as a keep bit --------
    lane = lax.broadcasted_iota(jnp.int32, (1, T), 1)
    prev = pltpu.roll(idx, shift=1, axis=1)           # prev[t] = idx[t-1] (wraps)
    prev = jnp.where(lane == 0, carry_ref[0], prev)   # cross-tile carry (SMEM)
    keep = jnp.logical_and(idx != blank, idx != prev)

    # Lane-dense packed output: low 16 bits = argmax index, bit 16 = keep.
    out_ref[...] = idx | jnp.left_shift(keep.astype(jnp.int32), 16)

    # Carry this tile's last argmax to the next grid step (sequential axis).
    carry_ref[0] = jnp.max(jnp.where(lane == T - 1, idx, -1))


@functools.partial(jax.jit, static_argnames=("blank",))
def greedy_ctc_device(emission, blank=0):
    """emission: (T, L) logits. Returns packed int32 per timestep (idx | keep<<16)."""
    T, L = emission.shape
    assert L < (1 << 16), "label index must fit in 16 bits for the packed output"

    # Layout plumbing (wrapper side): time on the 128-wide lane axis, labels on
    # sublanes. Pad labels to a multiple of 8 with -inf (never wins argmax).
    e = emission.T                                                     # (L, T)
    L_pad = 8 * pl.cdiv(L, 8)
    if L_pad != L:
        e = jnp.pad(e, ((0, L_pad - L), (0, 0)), constant_values=-jnp.inf)

    # Tile the time axis so Pallas double-buffers HBM->VMEM. Cap the tile so
    # two emission buffers stay well under ~8 MiB (safe on v5e's 16 MiB default
    # scoped VMEM and v7x's 64 MiB physical VMEM alike).
    bytes_per_col = L_pad * e.dtype.itemsize * 2                       # x2: double buffer
    t_tile = max(128, min(512, ((8 << 20) // bytes_per_col) // 128 * 128))
    t_tile = min(t_tile, 128 * pl.cdiv(T, 128))
    T_pad = t_tile * pl.cdiv(T, t_tile)
    if T_pad != T:
        e = jnp.pad(e, ((0, 0), (0, T_pad - T)))                       # zeros; truncated on host

    kernel = functools.partial(greedy_ctc_kernel, blank=blank, num_labels=L)
    packed = pl.pallas_call(
        kernel,
        out_shape=jax.ShapeDtypeStruct((1, T_pad), jnp.int32),
        grid_spec=pltpu.PrefetchScalarGridSpec(
            num_scalar_prefetch=0,
            grid=(T_pad // t_tile,),
            in_specs=[pl.BlockSpec((L_pad, t_tile), lambda i: (0, i))],
            out_specs=pl.BlockSpec((1, t_tile), lambda i: (0, i)),
            scratch_shapes=[pltpu.SMEM((1,), jnp.int32)],
        ),
        compiler_params=pltpu.CompilerParams(
            # Sequential over T: the SMEM dedup carry crosses tile boundaries.
            dimension_semantics=("arbitrary",),
        ),
    )(e)
    return packed[0, :T]


class GreedyCTCDecoder:
    """Pallas-TPU greedy CTC decoder matching the PyTorch reference module."""

    def __init__(self, labels, blank=0):
        self.labels = labels
        self.blank = blank

    def __call__(self, emission):
        packed = np.asarray(jax.block_until_ready(
            greedy_ctc_device(jnp.asarray(emission), blank=self.blank)))
        idx = packed & 0xFFFF
        keep = (packed >> 16) & 1
        # TODO(synk): label lookup / string join is host glue with no Pallas equivalent.
        return ''.join(self.labels[int(i)] for i, k in zip(idx, keep) if k)


def _reference_decode(emission_np, labels, blank=0):
    ids = emission_np.argmax(-1)
    out, prev = [], None
    for i in ids:
        if i != prev and i != blank:
            out.append(labels[int(i)])
        prev = i
    return ''.join(out)


if __name__ == "__main__":
    # Deterministic synthetic label set (blank=0), 32 labels total.
    labels = ("-",) + tuple(chr(ord('a') + i) for i in range(26)) + ("|", "'", " ", ".", ",")
    assert len(labels) == 32

    decoder = GreedyCTCDecoder(labels, blank=0)
    key = jax.random.PRNGKey(0)

    # 1) Small case matching the module's demo shape [num_seq, num_label].
    emission = jax.random.normal(key, (16, 32), dtype=jnp.float32)
    out = decoder(emission)
    exp = _reference_decode(np.asarray(emission), labels, blank=0)
    assert out == exp, (out, exp)

    # 2) Longer sequence: exercises multiple T tiles + cross-tile dedup carry,
    #    blank removal and consecutive repeats statistically.
    emission2 = jax.random.normal(jax.random.PRNGKey(1), (1000, 32), dtype=jnp.float32)
    out2 = decoder(emission2)
    exp2 = _reference_decode(np.asarray(emission2), labels, blank=0)
    assert out2 == exp2, (out2[:64], exp2[:64])

    # 3) Deterministic seam test: a repeat straddling the tile boundary at t=512
    #    and a blank right after it must be handled by the SMEM carry.
    ids = (np.arange(1024) % 32).astype(np.int32)
    ids[511] = 7; ids[512] = 7; ids[513] = 0
    emission3 = jnp.asarray(np.eye(32, dtype=np.float32)[ids] * 5.0)
    out3 = decoder(emission3)
    exp3 = _reference_decode(np.asarray(emission3), labels, blank=0)
    assert out3 == exp3, (out3[:64], exp3[:64])

    print("KERNEL_OK")
</pallas_src>

<mosaic_0001>
module attributes {stable_mosaic.version = 11 : i64} {
  func.func @greedy_ctc_kernel(%arg0: i32, %arg1: memref<32x128xf32, #tpu.memory_space<vmem>>, %arg2: memref<1x128xi32, #tpu.memory_space<vmem>>, %arg3: memref<1xi32, #tpu.memory_space<smem>>) attributes {dimension_semantics = [#tpu.dimension_semantics<arbitrary>], iteration_bounds = array<i64: 1>, scalar_prefetch = 0 : i64, scratch_operands = 1 : i64, tpu.core_type = #tpu.core_type<tc>, window_params = [{transform_indices = @transform_0, window_bounds = array<i64: 32, 128>}, {transform_indices = @transform_1, window_bounds = array<i64: 1, 128>}]} {
    %c0_i32 = arith.constant 0 : i32
    %0 = arith.cmpi eq, %arg0, %c0_i32 : i32
    %1 = arith.extui %0 : i1 to i32
    %c0_i32_0 = arith.constant 0 : i32
    %2 = arith.cmpi ne, %1, %c0_i32_0 : i32
    scf.if %2 {
      %c-1_i32_15 = arith.constant -1 : i32
      %c0_16 = arith.constant 0 : index
      %63 = memref.load %arg3[%c0_16] : memref<1xi32, #tpu.memory_space<smem>>
      memref.store %c-1_i32_15, %arg3[%c0_16] : memref<1xi32, #tpu.memory_space<smem>>
    } else {
    }
    %c0 = arith.constant 0 : index
    %c0_1 = arith.constant 0 : index
    %3 = vector.load %arg1[%c0, %c0_1] : memref<32x128xf32, #tpu.memory_space<vmem>>, vector<8x128xf32>
    %4 = tpu.iota {dimensions = array<i32: 0>} : vector<8x128xi32>
    %c0_i32_2 = arith.constant 0 : i32
    %5 = vector.broadcast %c0_i32_2 : i32 to vector<8x128xi32>
    %6 = arith.addi %4, %5 : vector<8x128xi32>
    %c8 = arith.constant 8 : index
    %c0_3 = arith.constant 0 : index
    %7 = vector.load %arg1[%c8, %c0_3] : memref<32x128xf32, #tpu.memory_space<vmem>>, vector<8x128xf32>
    %8 = tpu.iota {dimensions = array<i32: 0>} : vector<8x128xi32>
    %c8_i32 = arith.constant 8 : i32
    %9 = vector.broadcast %c8_i32 : i32 to vector<8x128xi32>
    %10 = arith.addi %8, %9 : vector<8x128xi32>
    %c16 = arith.constant 16 : index
    %c0_4 = arith.constant 0 : index
    %11 = vector.load %arg1[%c16, %c0_4] : memref<32x128xf32, #tpu.memory_space<vmem>>, vector<8x128xf32>
    %12 = tpu.iota {dimensions = array<i32: 0>} : vector<8x128xi32>
    %c16_i32 = arith.constant 16 : i32
    %13 = vector.broadcast %c16_i32 : i32 to vector<8x128xi32>
    %14 = arith.addi %12, %13 : vector<8x128xi32>
    %c24 = arith.constant 24 : index
    %c0_5 = arith.constant 0 : index
    %15 = vector.load %arg1[%c24, %c0_5] : memref<32x128xf32, #tpu.memory_space<vmem>>, vector<8x128xf32>
    %16 = tpu.iota {dimensions = array<i32: 0>} : vector<8x128xi32>
    %c24_i32 = arith.constant 24 : i32
    %17 = vector.broadcast %c24_i32 : i32 to vector<8x128xi32>
    %18 = arith.addi %16, %17 : vector<8x128xi32>
    %19 = arith.cmpf oge, %3, %7 : vector<8x128xf32>
    %20 = arith.maximumf %3, %7 : vector<8x128xf32>
    %21 = arith.select %19, %6, %10 : vector<8x128xi1>, vector<8x128xi32>
    %22 = arith.cmpf oge, %11, %15 : vector<8x128xf32>
    %23 = arith.maximumf %11, %15 : vector<8x128xf32>
    %24 = arith.select %22, %14, %18 : vector<8x128xi1>, vector<8x128xi32>
    %25 = arith.cmpf oge, %20, %23 : vector<8x128xf32>
    %26 = arith.maximumf %20, %23 : vector<8x128xf32>
    %27 = arith.select %25, %21, %24 : vector<8x128xi1>, vector<8x128xi32>
    %cst = arith.constant dense<0xFF800000> : vector<128xf32>
    %28 = vector.multi_reduction <maximumf>, %26, %cst [0] : vector<8x128xf32> to vector<128xf32>
    %29 = vector.shape_cast %28 : vector<128xf32> to vector<1x128xf32>
    %30 = vector.broadcast %29 : vector<1x128xf32> to vector<8x128xf32>
    %31 = arith.cmpf oeq, %26, %30 : vector<8x128xf32>
    %c32_i32 = arith.constant 32 : i32
    %32 = vector.broadcast %c32_i32 : i32 to vector<8x128xi32>
    %33 = arith.select %31, %27, %32 : vector<8x128xi1>, vector<8x128xi32>
    %cst_6 = arith.constant dense<2147483647> : vector<128xi32>
    %34 = vector.multi_reduction <minsi>, %33, %cst_6 [0] : vector<8x128xi32> to vector<128xi32>
    %35 = vector.shape_cast %34 : vector<128xi32> to vector<1x128xi32>
    %c31_i32 = arith.constant 31 : i32
    %36 = vector.broadcast %c31_i32 : i32 to vector<1x128xi32>
    %37 = arith.minsi %35, %36 : vector<1x128xi32>
    %38 = tpu.iota {dimensions = array<i32: 1>} : vector<1x128xi32>
    %c1_i32 = arith.constant 1 : i32
    %39 = tpu.dynamic_rotate %37 by %c1_i32 dim 1 : vector<1x128xi32>, i32 -> vector<1x128xi32>
    %c0_i32_7 = arith.constant 0 : i32
    %40 = vector.broadcast %c0_i32_7 : i32 to vector<1x128xi32>
    %41 = arith.cmpi eq, %38, %40 : vector<1x128xi32>
    %c0_8 = arith.constant 0 : index
    %42 = memref.load %arg3[%c0_8] : memref<1xi32, #tpu.memory_space<smem>>
    %43 = vector.broadcast %42 : i32 to vector<1x128xi32>
    %44 = arith.select %41, %43, %39 : vector<1x128xi1>, vector<1x128xi32>
    %c0_i32_9 = arith.constant 0 : i32
    %45 = vector.broadcast %c0_i32_9 : i32 to vector<1x128xi32>
    %46 = arith.cmpi ne, %37, %45 : vector<1x128xi32>
    %47 = arith.cmpi ne, %37, %44 : vector<1x128xi32>
    %48 = arith.andi %46, %47 : vector<1x128xi1>
    %49 = arith.extui %48 : vector<1x128xi1> to vector<1x128xi32>
    %c16_i32_10 = arith.constant 16 : i32
    %50 = vector.broadcast %c16_i32_10 : i32 to vector<1x128xi32>
    %51 = arith.shli %49, %50 : vector<1x128xi32>
    %52 = arith.ori %37, %51 : vector<1x128xi32>
    %c0_11 = arith.constant 0 : index
    %c0_12 = arith.constant 0 : index
    %53 = vector.load %arg2[%c0_11, %c0_12] : memref<1x128xi32, #tpu.memory_space<vmem>>, vector<1x128xi32>
    tpu.vector_store %arg2[%c0_11, %c0_12], %52 {strides = array<i32>} : memref<1x128xi32, #tpu.memory_space<vmem>>, vector<1x128xi32>,
    %c127_i32 = arith.constant 127 : i32
    %54 = vector.broadcast %c127_i32 : i32 to vector<1x128xi32>
    %55 = arith.cmpi eq, %38, %54 : vector<1x128xi32>
    %c-1_i32 = arith.constant -1 : i32
    %56 = vector.broadcast %c-1_i32 : i32 to vector<1x128xi32>
    %57 = arith.select %55, %37, %56 : vector<1x128xi1>, vector<1x128xi32>
    %58 = vector.shape_cast %57 : vector<1x128xi32> to vector<1x1x128xi32>
    %cst_13 = arith.constant dense<-2147483648> : vector<1xi32>
    %59 = vector.multi_reduction <maxsi>, %58, %cst_13 [1, 2] : vector<1x1x128xi32> to vector<1xi32>
    %60 = vector.shape_cast %59 : vector<1xi32> to vector<1x1x1xi32>
    %61 = vector.extract %60[0, 0, 0] : i32 from vector<1x1x1xi32>
    %c0_14 = arith.constant 0 : index
    %62 = memref.load %arg3[%c0_14] : memref<1xi32, #tpu.memory_space<smem>>
    memref.store %61, %arg3[%c0_14] : memref<1xi32, #tpu.memory_space<smem>>
    return
  }
  func.func @transform_0(%arg0: i32) -> (i32, i32) {
    %c0_i32 = arith.constant 0 : i32
    %c0_i32_0 = arith.constant 0 : i32
    return %c0_i32, %arg0 : i32, i32
  }
  func.func @transform_1(%arg0: i32) -> (i32, i32) {
    %c0_i32 = arith.constant 0 : i32
    %c0_i32_0 = arith.constant 0 : i32
    return %c0_i32, %arg0 : i32, i32
  }
}

</mosaic_0001>

<llo_original>
// kernel: greedy_ctc_device.1
$region0: #{greedy_ctc_device.1}
  #allocation0 [shape = 'u32[]', space=smem, size = 0x4, offset = 0x4, fixed_abs, tag = 'smem constant byte address 0x4 - core index']
  #allocation1 [shape = 'u32[144,128]{1,0:T(1,128)}', space=vmem, size = 0x12000, scoped, tag = 'internal scratch']
  #allocation2 [shape = 's32[1]{0:T(128)}', space=smem, size = 0x200, scoped, tag = 'scratch operand']
  %s0 = inlined_call_operand.vmem [shape: f32[32,128], index: 0, kind: input, shape index: {}]
  %s1 = inlined_call_operand.vmem [shape: s32[1,128], index: 1, kind: output, shape index: {}]
  %s2 = sld [smem:[#allocation0]]
  $region18: #{greedy_ctc_device.1} parent=0
    _
  %s4 = ssub.s32 1, %s2
  %s5 = scalar_select 0, %s4, %s2
  // Predicated region
  $region2: #{greedy_ctc_device.1} parent=0 // pred_check
    _
  $region3: #{greedy_ctc_device.1} parent=0 // pred_check_branch
    %7 = sbr.rel (0) target = $region5
  $region4: #{greedy_ctc_device.1} parent=0 // pred_region
    _
  $region5: #{greedy_ctc_device.1} parent=0 // pred_fallthru
    _
  %p8 = scmp.eq.s32.totalorder 0, 0
  // Predicated region
  $region6: #{greedy_ctc_device.1} parent=0 // pred_check
    %p9 = pneg %p8
  $region7: #{greedy_ctc_device.1} parent=0 // pred_check_branch
    %11 = sbr.rel (%p9) target = $region9
  $region8: #{greedy_ctc_device.1} parent=0 // pred_region
    %s12 = scalar_lea.smem [#allocation2], 0
    %13 = sst [smem:[%s12]] 4294967295
  $region9: #{greedy_ctc_device.1} parent=0 // pred_fallthru
    _
  %v14 = vld [vmem:[%s0] sm:$0xff]
  %v15 = vlaneseq
  %v16 = vshrl.u32 %v15, 7
  %v17 = vld [vmem:[%s0 + $0x8] sm:$0xff]
  %v18 = vadd.s32 %v16, 8
  %v19 = vld [vmem:[%s0 + $0x10] sm:$0xff]
  %v20 = vadd.s32 %v16, 16
  %v21 = vld [vmem:[%s0 + $0x18] sm:$0xff]
  %v22 = vadd.s32 %v16, 24
  %vm23 = vcmp.ge.f32.partialorder %v14, %v17
  %v24 = vmax.f32 %v14, %v17
  %v25 = vsel %vm23, %v16, %v18
  %vm26 = vcmp.ge.f32.partialorder %v19, %v21
  %v27 = vmax.f32 %v19, %v21
  %v28 = vsel %vm26, %v20, %v22
  %vm29 = vcmp.ge.f32.partialorder %v24, %v27
  %v30 = vmax.f32 %v24, %v27
  %v31 = vsel %vm29, %v25, %v28
  %v32 = vrot.slane %v30, 4
  %v33 = vmax.f32 %v30, %v32
  %v34 = vrot.slane %v33, 2
  %v35 = vmax.f32 %v33, %v34
  %v36 = vrot.slane %v35, 1
  %v37 = vmax.f32 %v35, %v36
  %vm38 = vcmp.eq.f32.partialorder %v30, %v37
  %v39 = vsel %vm38, %v31, 32
  %v40 = vrot.slane %v39, 4
  %vm41 = vcmp.lt.s32.totalorder %v39, %v40
  %v42 = vsel %vm41, %v39, %v40
  %v43 = vrot.slane %v42, 2
  %vm44 = vcmp.lt.s32.totalorder %v42, %v43
  %v45 = vsel %vm44, %v42, %v43
  %v46 = vrot.slane %v45, 1
  %vm47 = vcmp.lt.s32.totalorder %v45, %v46
  %v48 = vsel %vm47, %v45, %v46
  %vm49 = vcmp.lt.s32.totalorder %v48, 31
  %v50 = vsel %vm49, %v48, 31
  %v51 = vlaneseq
  %v52 = vand.u32 %v51, 127
  %53 = vrot.lane.b32.xlu0 %v50, 1
  %v54 = vpop.permute.xlu0 %53
  %vm55 = vcmp.eq.s32.totalorder %v52, 0
  %s56 = sld [smem:[#allocation2]]
  %v57 = vstv %s56
  %v58 = vsel %vm55, %v57, %v54
  %vm59 = vcmp.ne.s32.totalorder %v50, 0
  %vm60 = vcmp.ne.s32.totalorder %v50, %v58
  %vm61 = vmand %vm59, %vm60
  %v62 = vsel %vm61, 1, 0
  %v63 = vshll.u32 %v62, 16
  %v64 = vor.u32 %v50, %v63
  %65 = vst [vmem:[%s1] sm:$0x1] %v64
  %vm66 = vcmp.eq.s32.totalorder %v52, 127
  %v67 = vsel %vm66, %v50, 4294967295
  %v68 = vand.u32 %v67, 65535
  %v69 = vshra.s32 %v67, 16
  %v70 = vcvt.s32.f32 %v68
  %v71 = vcvt.s32.f32 %v69
  %72 = vmax.xlane.f32.xlu0 %v71
  %v73 = vpop.xlane.xlu0 %72
  %vm74 = vcmp.eq.f32.partialorder %v71, %v73
  %v75 = vsel %vm74, %v70, -inf
  %76 = vmax.xlane.f32.xlu0 %v75
  %v77 = vpop.xlane.xlu0 %76
  %v78 = vcvt.f32.s32 %v77
  %v79 = vcvt.f32.s32 %v73
  %v80 = vshll.u32 %v79, 16
  %v81 = vadd.s32 %v80, %v78
  %s82 = vtos %v81
  %s83 = scalar_lea.smem [#allocation2], 0
  %84 = sst [smem:[%s83]] %s82
  // Predicated region
  $region10: #{greedy_ctc_device.1} parent=0 // pred_check
    _
  $region11: #{greedy_ctc_device.1} parent=0 // pred_check_branch
    %86 = sbr.rel (0) target = $region13
  $region12: #{greedy_ctc_device.1} parent=0 // pred_region
    _
  $region13: #{greedy_ctc_device.1} parent=0 // pred_fallthru
    _
  // Predicated region
  $region14: #{greedy_ctc_device.1} parent=0 // pred_check
    _
  $region15: #{greedy_ctc_device.1} parent=0 // pred_check_branch
    %88 = sbr.rel (0) target = $region17
  $region16: #{greedy_ctc_device.1} parent=0 // pred_region
    _
  $region17: #{greedy_ctc_device.1} parent=0 // pred_fallthru
    _

</llo_original>
